<compile_context>
chip_gen: v7x
topology: tpu7x:2x2x1
jax: 0.10.0
libtpu: 0.0.40
codegen_flags: <defaults>
</compile_context>

<pallas_src>
import numpy as np
import jax
import jax.numpy as jnp
from jax.experimental import pallas as pl
from jax.experimental.pallas import tpu as pltpu

# ---------------- fixed model configuration ----------------
N_BINS = 64
OUTPUT_DIM = 4          # stands in for const.OUTPUT_DIM
STRIDE = 2
FILTERS = (8, 16)
KERNELS = (3, 5)
DENSE = 32
BN_EPS = 1e-5

L0 = N_BINS // STRIDE           # 32  (conv0 output length)
L1 = L0 // STRIDE               # 16  (conv1 output length)
C0, C1 = FILTERS
FLAT = C1 * L1                  # 256 (= self.flattened_neurons)
LANE0 = C0 * L1                 # 128 (half of the even||odd conv0 slab)
A0_W = 2 * LANE0                # 256 (conv0 activation lane width, even||odd)


# ---------------- fused Pallas kernel ----------------
def fused_cnn_kernel(x_ref, g_ref, b0_ref, m_ref, b1c_ref,
                     w1_ref, b1m_ref, w2_ref, b2m_ref, o_ref):
    # 1) conv0 + BN0 + ReLU: one (BT,64)x(64,256) bf16 matmul, f32 accumulate.
    #    Columns 0..127 = even conv0 positions (c0*16+l), 128..255 = odd.
    a0 = jnp.maximum(
        jnp.dot(x_ref[...].astype(jnp.bfloat16), g_ref[...],
                preferred_element_type=jnp.float32) + b0_ref[...], 0.0)

    # 2) conv1 + BN1 + ReLU + flatten: single K=256 contraction; the result is
    #    directly the flattened (BT, C1*L1) row PyTorch's view(-1, 256) makes.
    flat = jnp.maximum(
        jnp.dot(a0.astype(jnp.bfloat16), m_ref[...],
                preferred_element_type=jnp.float32) + b1c_ref[...], 0.0)

    # 3) MLP head: bf16 MXU operands, f32 accumulation, f32 elementwise.
    h = jnp.maximum(
        jnp.dot(flat.astype(jnp.bfloat16), w1_ref[...],
                preferred_element_type=jnp.float32) + b1m_ref[...], 0.0)
    z = jnp.dot(h.astype(jnp.bfloat16), w2_ref[...],
                preferred_element_type=jnp.float32) + b2m_ref[...]
    o_ref[...] = jax.nn.sigmoid(z)


# ---------------- one-time parameter folding (hoisted out of forward) -------
def prepare_params(params):
    """Fold Conv+BatchNorm(eval) and re-layout all weights for the fused kernel."""
    f32 = np.float32
    bf16 = jnp.bfloat16

    # ---- conv0 + BN0 fold ----
    w0 = np.asarray(params["conv0_w"], f32)                      # (8, 1, 3)
    b0 = np.asarray(params["conv0_b"], f32)
    s0 = np.asarray(params["bn0_g"], f32) / np.sqrt(
        np.asarray(params["bn0_v"], f32) + BN_EPS)
    w0e = w0[:, 0, :] * s0[:, None]                              # (8, 3)
    b0e = (b0 - np.asarray(params["bn0_m"], f32)) * s0 + np.asarray(params["bn0_b"], f32)

    # Gfold: x (64 lanes) -> conv0 even||odd pre-activations (256 lanes).
    # conv0: stride=2, k=3, pad=1 -> z0[c, p] = sum_t w0e[c,t] * x[2p - 1 + t]
    Gfold = np.zeros((N_BINS, A0_W), f32)
    pad0 = KERNELS[0] // 2
    for c in range(C0):
        for p in range(L0):
            col = (p % 2) * LANE0 + c * L1 + (p // 2)
            for t in range(KERNELS[0]):
                src = STRIDE * p - pad0 + t
                if 0 <= src < N_BINS:
                    Gfold[src, col] += w0e[c, t]
    b0cat = np.concatenate([np.repeat(b0e, L1)] * 2)[None, :]    # (1, 256)

    # ---- conv1 + BN1 fold into one (256, 256) matrix ----
    # conv1: stride=2, k=5, pad=2; flattened output column = co*16 + q.
    w1 = np.asarray(params["conv1_w"], f32)                      # (16, 8, 5)
    b1 = np.asarray(params["conv1_b"], f32)
    s1 = np.asarray(params["bn1_g"], f32) / np.sqrt(
        np.asarray(params["bn1_v"], f32) + BN_EPS)
    w1e = w1 * s1[:, None, None]
    b1e = (b1 - np.asarray(params["bn1_m"], f32)) * s1 + np.asarray(params["bn1_b"], f32)

    M = np.zeros((A0_W, FLAT), f32)
    pad1 = KERNELS[1] // 2
    for co in range(C1):
        for ci in range(C0):
            for q in range(L1):
                col = co * L1 + q
                for t in range(KERNELS[1]):
                    m = STRIDE * q - pad1 + t                    # conv0 output pos
                    if 0 <= m < L0:
                        lane = (m % 2) * LANE0 + ci * L1 + (m // 2)
                        M[lane, col] += w1e[co, ci, t]
    b1cat = np.repeat(b1e, L1)[None, :]                          # (1, 256)

    return {
        # conv-path matmul operands stored bf16 (f32 accumulate in-kernel)
        "Gfold": jnp.asarray(Gfold, dtype=bf16),
        "b0": jnp.asarray(b0cat),
        "M": jnp.asarray(M, dtype=bf16),
        "b1c": jnp.asarray(b1cat),
        # MLP weights transposed + bf16; biases stay f32
        "W1": jnp.asarray(np.asarray(params["w1"], f32).T, dtype=bf16),
        "b1": jnp.asarray(np.asarray(params["b1"], f32)[None, :]),
        "W2": jnp.asarray(np.asarray(params["w2"], f32).T, dtype=bf16),
        "b2": jnp.asarray(np.asarray(params["b2"], f32)[None, :]),
    }


def _round_up(v, m):
    return ((v + m - 1) // m) * m


# ---------------- forward (single pallas_call) ----------------
def fused_forward(x, prep):
    B = x.shape[0]
    x2d = x.reshape(B, N_BINS)

    # Batch tiling:
    #   B <= 8   : one full block (block shape == full array, no padding).
    #   B  > 8   : >=2 blocks (keeps both v7x TensorCores busy) of up to 512
    #              rows (multiple of 8 sublanes) to amortize per-step overhead.
    # No jnp.pad: grid = pl.cdiv(B, BT); a partial last block's OOB rows are
    # masked on writeback by Pallas.
    if B <= 8:
        BT = B
    else:
        BT = min(_round_up(pl.cdiv(B, 2), 8), 512)
    nb = pl.cdiv(B, BT)

    full = lambda i: (0, 0)
    mm_flops = 2 * B * (N_BINS * A0_W + A0_W * FLAT + FLAT * DENSE + DENSE * OUTPUT_DIM)
    weight_bytes = (2 * (N_BINS * A0_W + A0_W * FLAT + FLAT * DENSE + DENSE * OUTPUT_DIM)
                    + 4 * (A0_W + FLAT + DENSE + OUTPUT_DIM))
    cost = pl.CostEstimate(
        flops=mm_flops,
        transcendentals=B * OUTPUT_DIM,                  # sigmoid
        bytes_accessed=B * (N_BINS + OUTPUT_DIM) * 4 + weight_bytes)

    out = pl.pallas_call(
        fused_cnn_kernel,
        out_shape=jax.ShapeDtypeStruct((B, OUTPUT_DIM), jnp.float32),
        grid=(nb,),
        in_specs=[
            pl.BlockSpec((BT, N_BINS), lambda i: (i, 0)),        # x
            pl.BlockSpec((N_BINS, A0_W), full),                  # Gfold (bf16)
            pl.BlockSpec((1, A0_W), full),                       # conv0/BN0 bias
            pl.BlockSpec((A0_W, FLAT), full),                    # merged conv1 matrix (bf16)
            pl.BlockSpec((1, FLAT), full),                       # conv1/BN1 bias
            pl.BlockSpec((FLAT, DENSE), full),                   # MLP W1 (bf16)
            pl.BlockSpec((1, DENSE), full),                      # MLP b1
            pl.BlockSpec((DENSE, OUTPUT_DIM), full),             # MLP W2 (bf16)
            pl.BlockSpec((1, OUTPUT_DIM), full),                 # MLP b2
        ],
        out_specs=pl.BlockSpec((BT, OUTPUT_DIM), lambda i: (i, 0)),
        compiler_params=pltpu.CompilerParams(
            dimension_semantics=("parallel",)),
        cost_estimate=cost,
    )(x2d, prep["Gfold"], prep["b0"], prep["M"], prep["b1c"],
      prep["W1"], prep["b1"], prep["W2"], prep["b2"])
    return out


# ---------------- pure-JAX reference (for correctness check) ----------------
def ref_forward(x, params):
    h = x
    for i in range(len(FILTERS)):
        w, b = params[f"conv{i}_w"], params[f"conv{i}_b"]
        pad = KERNELS[i] // 2
        h = jax.lax.conv_general_dilated(
            h, w, window_strides=(STRIDE,), padding=[(pad, pad)],
            dimension_numbers=("NCH", "OIH", "NCH"))
        h = h + b[None, :, None]
        scale = params[f"bn{i}_g"] / jnp.sqrt(params[f"bn{i}_v"] + BN_EPS)
        h = (h - params[f"bn{i}_m"][None, :, None]) * scale[None, :, None] \
            + params[f"bn{i}_b"][None, :, None]
        h = jnp.maximum(h, 0.0)
    flat = h.reshape(h.shape[0], -1)
    hh = jnp.maximum(flat @ params["w1"].T + params["b1"], 0.0)
    return jax.nn.sigmoid(hh @ params["w2"].T + params["b2"])


def init_params(key):
    ks = jax.random.split(key, 8)
    p = {}
    c_in = 1
    for i, (c_out, k) in enumerate(zip(FILTERS, KERNELS)):
        p[f"conv{i}_w"] = 0.1 * jax.random.normal(ks[2 * i], (c_out, c_in, k), jnp.float32)
        p[f"conv{i}_b"] = 0.1 * jax.random.normal(ks[2 * i + 1], (c_out,), jnp.float32)
        # BatchNorm1d eval-mode defaults: gamma=1, beta=0, mean=0, var=1
        p[f"bn{i}_g"] = jnp.ones((c_out,), jnp.float32)
        p[f"bn{i}_b"] = jnp.zeros((c_out,), jnp.float32)
        p[f"bn{i}_m"] = jnp.zeros((c_out,), jnp.float32)
        p[f"bn{i}_v"] = jnp.ones((c_out,), jnp.float32)
        c_in = c_out
    p["w1"] = 0.05 * jax.random.normal(ks[4], (DENSE, FLAT), jnp.float32)
    p["b1"] = 0.05 * jax.random.normal(ks[5], (DENSE,), jnp.float32)
    p["w2"] = 0.05 * jax.random.normal(ks[6], (OUTPUT_DIM, DENSE), jnp.float32)
    p["b2"] = 0.05 * jax.random.normal(ks[7], (OUTPUT_DIM,), jnp.float32)
    return p


def _check(out, ref):
    out = np.asarray(out)
    ref = np.asarray(ref)
    # fully bf16 MXU-operand path (f32 accumulate) => relaxed tolerance
    assert np.allclose(out, ref, atol=1e-2, rtol=2e-2), \
        f"Pallas output mismatch vs reference (max abs err {np.max(np.abs(out - ref))})"


if __name__ == "__main__":
    key = jax.random.PRNGKey(0)
    k_x, k_x2, k_p = jax.random.split(key, 3)
    params = init_params(k_p)
    prep = prepare_params(params)          # one-time fold, hoisted out of forward
    fwd = jax.jit(fused_forward)

    # Small batch (single block): B=2
    x = jax.random.normal(k_x, (2, 1, N_BINS), jnp.float32)      # (B, C=1, n_bins)
    out = jax.block_until_ready(fwd(x, prep))
    assert out.shape == (2, OUTPUT_DIM), out.shape
    _check(out, ref_forward(x, params))

    # Larger batch: exercises the multi-block "parallel" grid (2 TC on v7x)
    x_big = jax.random.normal(k_x2, (112, 1, N_BINS), jnp.float32)
    out_big = jax.block_until_ready(fwd(x_big, prep))
    assert out_big.shape == (112, OUTPUT_DIM), out_big.shape
    _check(out_big, ref_forward(x_big, params))

    print("KERNEL_OK")
</pallas_src>

<mosaic_0001>
module attributes {stable_mosaic.version = 11 : i64} {
  func.func @fused_cnn_kernel(%arg0: i32, %arg1: memref<2x64xf32, #tpu.memory_space<vmem>>, %arg2: memref<64x256xbf16, #tpu.memory_space<vmem>>, %arg3: memref<1x256xf32, #tpu.memory_space<vmem>>, %arg4: memref<256x256xbf16, #tpu.memory_space<vmem>>, %arg5: memref<1x256xf32, #tpu.memory_space<vmem>>, %arg6: memref<256x32xbf16, #tpu.memory_space<vmem>>, %arg7: memref<1x32xf32, #tpu.memory_space<vmem>>, %arg8: memref<32x4xbf16, #tpu.memory_space<vmem>>, %arg9: memref<1x4xf32, #tpu.memory_space<vmem>>, %arg10: memref<2x4xf32, #tpu.memory_space<vmem>>) attributes {dimension_semantics = [#tpu.dimension_semantics<parallel>], iteration_bounds = array<i64: 1>, scalar_prefetch = 0 : i64, scratch_operands = 0 : i64, tpu.core_type = #tpu.core_type<tc>, window_params = [{transform_indices = @transform_0, window_bounds = array<i64: 2, 64>}, {pipeline_mode = #tpu.pipeline_mode<synchronous>, transform_indices = @transform_1, window_bounds = array<i64: 64, 256>}, {pipeline_mode = #tpu.pipeline_mode<synchronous>, transform_indices = @transform_2, window_bounds = array<i64: 1, 256>}, {pipeline_mode = #tpu.pipeline_mode<synchronous>, transform_indices = @transform_3, window_bounds = array<i64: 256, 256>}, {pipeline_mode = #tpu.pipeline_mode<synchronous>, transform_indices = @transform_4, window_bounds = array<i64: 1, 256>}, {pipeline_mode = #tpu.pipeline_mode<synchronous>, transform_indices = @transform_5, window_bounds = array<i64: 256, 32>}, {pipeline_mode = #tpu.pipeline_mode<synchronous>, transform_indices = @transform_6, window_bounds = array<i64: 1, 32>}, {pipeline_mode = #tpu.pipeline_mode<synchronous>, transform_indices = @transform_7, window_bounds = array<i64: 32, 4>}, {pipeline_mode = #tpu.pipeline_mode<synchronous>, transform_indices = @transform_8, window_bounds = array<i64: 1, 4>}, {transform_indices = @transform_9, window_bounds = array<i64: 2, 4>}]} {
    %c0 = arith.constant 0 : index
    %c0_0 = arith.constant 0 : index
    %0 = vector.load %arg1[%c0, %c0_0] : memref<2x64xf32, #tpu.memory_space<vmem>>, vector<2x64xf32>
    %1 = arith.truncf %0 : vector<2x64xf32> to vector<2x64xbf16>
    %c0_1 = arith.constant 0 : index
    %c0_2 = arith.constant 0 : index
    %2 = vector.load %arg2[%c0_1, %c0_2] : memref<64x256xbf16, #tpu.memory_space<vmem>>, vector<64x256xbf16>
    %cst = arith.constant dense<0.000000e+00> : vector<2x256xf32>
    %3 = tpu.matmul %1, %2, %cst {dimension_numbers = #tpu.dot_dimension_numbers<[1], [0], [0], [1], [0, 0, 1, 1], [], []>} : vector<2x64xbf16>, vector<64x256xbf16>, vector<2x256xf32> -> vector<2x256xf32>
    %c0_3 = arith.constant 0 : index
    %c0_4 = arith.constant 0 : index
    %4 = vector.load %arg3[%c0_3, %c0_4] : memref<1x256xf32, #tpu.memory_space<vmem>>, vector<1x256xf32>
    %5 = vector.broadcast %4 : vector<1x256xf32> to vector<2x256xf32>
    %6 = arith.addf %3, %5 : vector<2x256xf32>
    %cst_5 = arith.constant 0.000000e+00 : f32
    %7 = vector.broadcast %cst_5 : f32 to vector<2x256xf32>
    %8 = arith.maximumf %6, %7 : vector<2x256xf32>
    %9 = arith.truncf %8 : vector<2x256xf32> to vector<2x256xbf16>
    %c0_6 = arith.constant 0 : index
    %c0_7 = arith.constant 0 : index
    %10 = vector.load %arg4[%c0_6, %c0_7] : memref<256x256xbf16, #tpu.memory_space<vmem>>, vector<256x256xbf16>
    %cst_8 = arith.constant dense<0.000000e+00> : vector<2x256xf32>
    %11 = tpu.matmul %9, %10, %cst_8 {dimension_numbers = #tpu.dot_dimension_numbers<[1], [0], [0], [1], [0, 0, 1, 1], [], []>} : vector<2x256xbf16>, vector<256x256xbf16>, vector<2x256xf32> -> vector<2x256xf32>
    %c0_9 = arith.constant 0 : index
    %c0_10 = arith.constant 0 : index
    %12 = vector.load %arg5[%c0_9, %c0_10] : memref<1x256xf32, #tpu.memory_space<vmem>>, vector<1x256xf32>
    %13 = vector.broadcast %12 : vector<1x256xf32> to vector<2x256xf32>
    %14 = arith.addf %11, %13 : vector<2x256xf32>
    %cst_11 = arith.constant 0.000000e+00 : f32
    %15 = vector.broadcast %cst_11 : f32 to vector<2x256xf32>
    %16 = arith.maximumf %14, %15 : vector<2x256xf32>
    %17 = arith.truncf %16 : vector<2x256xf32> to vector<2x256xbf16>
    %c0_12 = arith.constant 0 : index
    %c0_13 = arith.constant 0 : index
    %18 = vector.load %arg6[%c0_12, %c0_13] : memref<256x32xbf16, #tpu.memory_space<vmem>>, vector<256x32xbf16>
    %cst_14 = arith.constant dense<0.000000e+00> : vector<2x32xf32>
    %19 = tpu.matmul %17, %18, %cst_14 {dimension_numbers = #tpu.dot_dimension_numbers<[1], [0], [0], [1], [0, 0, 1, 1], [], []>} : vector<2x256xbf16>, vector<256x32xbf16>, vector<2x32xf32> -> vector<2x32xf32>
    %c0_15 = arith.constant 0 : index
    %c0_16 = arith.constant 0 : index
    %20 = vector.load %arg7[%c0_15, %c0_16] : memref<1x32xf32, #tpu.memory_space<vmem>>, vector<1x32xf32>
    %21 = vector.broadcast %20 : vector<1x32xf32> to vector<2x32xf32>
    %22 = arith.addf %19, %21 : vector<2x32xf32>
    %cst_17 = arith.constant 0.000000e+00 : f32
    %23 = vector.broadcast %cst_17 : f32 to vector<2x32xf32>
    %24 = arith.maximumf %22, %23 : vector<2x32xf32>
    %25 = arith.truncf %24 : vector<2x32xf32> to vector<2x32xbf16>
    %c0_18 = arith.constant 0 : index
    %c0_19 = arith.constant 0 : index
    %26 = vector.load %arg8[%c0_18, %c0_19] : memref<32x4xbf16, #tpu.memory_space<vmem>>, vector<32x4xbf16>
    %cst_20 = arith.constant dense<0.000000e+00> : vector<2x4xf32>
    %27 = tpu.matmul %25, %26, %cst_20 {dimension_numbers = #tpu.dot_dimension_numbers<[1], [0], [0], [1], [0, 0, 1, 1], [], []>} : vector<2x32xbf16>, vector<32x4xbf16>, vector<2x4xf32> -> vector<2x4xf32>
    %c0_21 = arith.constant 0 : index
    %c0_22 = arith.constant 0 : index
    %28 = vector.load %arg9[%c0_21, %c0_22] : memref<1x4xf32, #tpu.memory_space<vmem>>, vector<1x4xf32>
    %29 = vector.broadcast %28 : vector<1x4xf32> to vector<2x4xf32>
    %30 = arith.addf %27, %29 : vector<2x4xf32>
    %31 = arith.negf %30 : vector<2x4xf32>
    %32 = math.exp %31 : vector<2x4xf32>
    %cst_23 = arith.constant 1.000000e+00 : f32
    %33 = vector.broadcast %cst_23 : f32 to vector<2x4xf32>
    %34 = arith.addf %33, %32 : vector<2x4xf32>
    %35 = arith.divf %33, %34 : vector<2x4xf32>
    %c0_24 = arith.constant 0 : index
    %c0_25 = arith.constant 0 : index
    %36 = vector.load %arg10[%c0_24, %c0_25] : memref<2x4xf32, #tpu.memory_space<vmem>>, vector<2x4xf32>
    tpu.vector_store %arg10[%c0_24, %c0_25], %35 {strides = array<i32>} : memref<2x4xf32, #tpu.memory_space<vmem>>, vector<2x4xf32>,
    return
  }
  func.func @transform_0(%arg0: i32) -> (i32, i32) {
    %c0_i32 = arith.constant 0 : i32
    %c0_i32_0 = arith.constant 0 : i32
    return %arg0, %c0_i32 : i32, i32
  }
  func.func @transform_1(%arg0: i32) -> (i32, i32) {
    %c0_i32 = arith.constant 0 : i32
    %c0_i32_0 = arith.constant 0 : i32
    %c0_i32_1 = arith.constant 0 : i32
    return %c0_i32, %c0_i32_0 : i32, i32
  }
  func.func @transform_2(%arg0: i32) -> (i32, i32) {
    %c0_i32 = arith.constant 0 : i32
    %c0_i32_0 = arith.constant 0 : i32
    %c0_i32_1 = arith.constant 0 : i32
    return %c0_i32, %c0_i32_0 : i32, i32
  }
  func.func @transform_3(%arg0: i32) -> (i32, i32) {
    %c0_i32 = arith.constant 0 : i32
    %c0_i32_0 = arith.constant 0 : i32
    %c0_i32_1 = arith.constant 0 : i32
    return %c0_i32, %c0_i32_0 : i32, i32
  }
  func.func @transform_4(%arg0: i32) -> (i32, i32) {
    %c0_i32 = arith.constant 0 : i32
    %c0_i32_0 = arith.constant 0 : i32
    %c0_i32_1 = arith.constant 0 : i32
    return %c0_i32, %c0_i32_0 : i32, i32
  }
  func.func @transform_5(%arg0: i32) -> (i32, i32) {
    %c0_i32 = arith.constant 0 : i32
    %c0_i32_0 = arith.constant 0 : i32
    %c0_i32_1 = arith.constant 0 : i32
    return %c0_i32, %c0_i32_0 : i32, i32
  }
  func.func @transform_6(%arg0: i32) -> (i32, i32) {
    %c0_i32 = arith.constant 0 : i32
    %c0_i32_0 = arith.constant 0 : i32
    %c0_i32_1 = arith.constant 0 : i32
    return %c0_i32, %c0_i32_0 : i32, i32
  }
  func.func @transform_7(%arg0: i32) -> (i32, i32) {
    %c0_i32 = arith.constant 0 : i32
    %c0_i32_0 = arith.constant 0 : i32
    %c0_i32_1 = arith.constant 0 : i32
    return %c0_i32, %c0_i32_0 : i32, i32
  }
  func.func @transform_8(%arg0: i32) -> (i32, i32) {
    %c0_i32 = arith.constant 0 : i32
    %c0_i32_0 = arith.constant 0 : i32
    %c0_i32_1 = arith.constant 0 : i32
    return %c0_i32, %c0_i32_0 : i32, i32
  }
  func.func @transform_9(%arg0: i32) -> (i32, i32) {
    %c0_i32 = arith.constant 0 : i32
    %c0_i32_0 = arith.constant 0 : i32
    return %arg0, %c0_i32 : i32, i32
  }
}

</mosaic_0001>

<llo_original>
// kernel: fused_forward.1
$region0: #{fused_forward.1}
  #allocation0 [shape = 'u32[]', space=smem, size = 0x4, offset = 0x4, fixed_abs, tag = 'smem constant byte address 0x4 - core index']
  #allocation1 [shape = 'u32[144,128]{1,0:T(1,128)}', space=vmem, size = 0x12000, scoped, tag = 'internal scratch']
  %s0 = inlined_call_operand.vmem [shape: f32[2,64], index: 0, kind: input, shape index: {}]
  %s1 = inlined_call_operand.vmem [shape: bf16[64,256], index: 1, kind: input, shape index: {}]
  %s2 = inlined_call_operand.vmem [shape: f32[1,256], index: 2, kind: input, shape index: {}]
  %s3 = inlined_call_operand.hbm [shape: bf16[256,256], index: 3, kind: input, shape index: {}]
  %s4 = inlined_call_operand.vmem [shape: f32[1,256], index: 4, kind: input, shape index: {}]
  %s5 = inlined_call_operand.vmem [shape: bf16[256,32], index: 5, kind: input, shape index: {}]
  %s6 = inlined_call_operand.vmem [shape: f32[1,32], index: 6, kind: input, shape index: {}]
  %s7 = inlined_call_operand.vmem [shape: bf16[32,4], index: 7, kind: input, shape index: {}]
  %s8 = inlined_call_operand.vmem [shape: f32[1,4], index: 8, kind: input, shape index: {}]
  %s9 = inlined_call_operand.hbm [shape: f32[2,4], index: 9, kind: output, shape index: {}]
  %s10 = sld [smem:[#allocation0]]
  $region50: #{fused_forward.1} parent=0
    _
  %s12 = ssub.s32 1, %s10
  %s13 = scalar_select 0, %s12, %s10
  $region1: #{fused_forward.1} parent=0
    #allocation2 [shape = 'u8[131072]{0}', space=vmem, size = 0x20000, scoped, tag = 'input window, operand 3, single buffered']
    #allocation3 [shape = 's32[1]{0}', space=sflag, size = 0x4, scoped, tag = 'scoped memory for fused_forward.1']
    #allocation4 [shape = 's32[1]{0}', space=sflag, size = 0x4, scoped, tag = 'scoped memory for fused_forward.1']
    #allocation5 [shape = 'u8[1024]{0}', space=vmem, size = 0x400, scoped, tag = 'output window, operand 0, single buffered']
    %14 = vsyncpa [#allocation3], 0
    %15 = vsyncpa [#allocation4], 0
    // Predicated region
    $region2: #{fused_forward.1} parent=1 // pred_check
      _
    $region3: #{fused_forward.1} parent=1 // pred_check_branch
      %17 = sbr.rel (0) target = $region5
    $region4: #{fused_forward.1} parent=1 // pred_region
      _
    $region5: #{fused_forward.1} parent=1 // pred_fallthru
      _
    // Predicated region
    $region6: #{fused_forward.1} parent=1 // pred_check
      _
    $region7: #{fused_forward.1} parent=1 // pred_check_branch
      %19 = sbr.rel (0) target = $region9
    $region8: #{fused_forward.1} parent=1 // pred_region
      _
    $region9: #{fused_forward.1} parent=1 // pred_fallthru
      _
    // Predicated region
    $region10: #{fused_forward.1} parent=1 // pred_check
      _
    $region11: #{fused_forward.1} parent=1 // pred_check_branch
      %21 = sbr.rel (0) target = $region13
    $region12: #{fused_forward.1} parent=1 // pred_region
      _
    $region13: #{fused_forward.1} parent=1 // pred_fallthru
      _
    // Predicated region
    $region14: #{fused_forward.1} parent=1 // pred_check
      _
    $region15: #{fused_forward.1} parent=1 // pred_check_branch
      %23 = sbr.rel (0) target = $region17
    $region16: #{fused_forward.1} parent=1 // pred_region
      %s25 = ssub.s32 4096, 4096
      %26 = vsyncadd [#allocation3], %s25
      %s27 = sshll.u32 [#allocation2], 4
      %s28 = int_to_ptr.vmem [resolvable:$true] %s27
      %33 = dma.hbm_to_vmem [thread:$0]  %s3, 4096, %s28, [#allocation3], 128, 128, 8
    $region17: #{fused_forward.1} parent=1 // pred_fallthru
      _
    // Predicated region
    $region18: #{fused_forward.1} parent=1 // pred_check
      _
    $region19: #{fused_forward.1} parent=1 // pred_check_branch
      %35 = sbr.rel (0) target = $region21
    $region20: #{fused_forward.1} parent=1 // pred_region
      _
    $region21: #{fused_forward.1} parent=1 // pred_fallthru
      _
    // Predicated region
    $region22: #{fused_forward.1} parent=1 // pred_check
      _
    $region23: #{fused_forward.1} parent=1 // pred_check_branch
      %37 = sbr.rel (0) target = $region25
    $region24: #{fused_forward.1} parent=1 // pred_region
      _
    $region25: #{fused_forward.1} parent=1 // pred_fallthru
      _
    // Predicated region
    $region26: #{fused_forward.1} parent=1 // pred_check
      _
    $region27: #{fused_forward.1} parent=1 // pred_check_branch
      %39 = sbr.rel (0) target = $region29
    $region28: #{fused_forward.1} parent=1 // pred_region
      _
    $region29: #{fused_forward.1} parent=1 // pred_fallthru
      _
    // Predicated region
    $region30: #{fused_forward.1} parent=1 // pred_check
      _
    $region31: #{fused_forward.1} parent=1 // pred_check_branch
      %41 = sbr.rel (0) target = $region33
    $region32: #{fused_forward.1} parent=1 // pred_region
      _
    $region33: #{fused_forward.1} parent=1 // pred_fallthru
      _
    // Predicated region
    $region34: #{fused_forward.1} parent=1 // pred_check
      _
    $region35: #{fused_forward.1} parent=1 // pred_check_branch
      %43 = sbr.rel (0) target = $region37
    $region36: #{fused_forward.1} parent=1 // pred_region
      _
    $region37: #{fused_forward.1} parent=1 // pred_fallthru
      _
    // Predicated region
    $region38: #{fused_forward.1} parent=1 // pred_check
      _
    $region39: #{fused_forward.1} parent=1 // pred_check_branch
      %45 = sbr.rel (0) target = $region41
    $region40: #{fused_forward.1} parent=1 // pred_region
      %46 = dma.done [#allocation3], 4096
    $region41: #{fused_forward.1} parent=1 // pred_fallthru
      _
    %v48 = vld [vmem:[%s0] sm:$0x3]
    %v49 = vpack.c.bf16 %v48, %v48
    %v50 = vld [vmem:[%s1] sm:$0xff]
    %v51 = vld [vmem:[%s1 + $0x8] sm:$0xff]
    %v52 = vld [vmem:[%s1 + $0x10] sm:$0xff]
    %v53 = vld [vmem:[%s1 + $0x18] sm:$0xff]
    %v54 = vld [vmem:[%s1 + $0x20] sm:$0xff]
    %v55 = vld [vmem:[%s1 + $0x28] sm:$0xff]
    %v56 = vld [vmem:[%s1 + $0x30] sm:$0xff]
    %v57 = vld [vmem:[%s1 + $0x38] sm:$0xff]
    %v58 = vld [vmem:[%s2] sm:$0x3]
    %v60 = vlaneseq
    %v61 = vshrl.u32 %v60, 7
    %v62 = vsub.s32 0, %v61
    %v63 = vrot.slane %v58, %v62
    %v64 = vlaneseq
    %v65 = vshrl.u32 %v64, 7
    %v66 = vsub.s32 1, %v65
    %v67 = vrot.slane %v58, %v66
    %v78 = vunpack.c.l.b16 %v50
    %v79 = vunpack.c.h.b16 %v50
    %v80 = vunpack.c.l.b16 %v51
    %v81 = vunpack.c.h.b16 %v51
    %v82 = vunpack.c.l.b16 %v52
    %v83 = vunpack.c.h.b16 %v52
    %v84 = vunpack.c.l.b16 %v53
    %v85 = vunpack.c.h.b16 %v53
    %v86 = vunpack.c.l.b16 %v54
    %v87 = vunpack.c.h.b16 %v54
    %v88 = vunpack.c.l.b16 %v55
    %v89 = vunpack.c.h.b16 %v55
    %v90 = vunpack.c.l.b16 %v56
    %v91 = vunpack.c.h.b16 %v56
    %v92 = vunpack.c.l.b16 %v57
    %v93 = vunpack.c.h.b16 %v57
    %v94 = vpack.c.b16 %v80, %v78
    %v95 = vpack.c.b16 %v81, %v79
    %v96 = vpack.c.b16 %v84, %v82
    %v97 = vpack.c.b16 %v85, %v83
    %v98 = vpack.c.b16 %v88, %v86
    %v99 = vpack.c.b16 %v89, %v87
    %v100 = vpack.c.b16 %v92, %v90
    %v101 = vpack.c.b16 %v93, %v91
    %vm110 = vcmask 523264
    %v112 = vsel %vm110, %v49, 0
    %114 = vmatprep.subr.bf16.mxu0 %v95
    %115 = vmatpush1.bf16.msra.mxu0 %v94
    %116 = vmatprep.subr.bf16.mxu0 %v97
    %117 = vmatpush1.bf16.msra.mxu0 %v96
    %118 = vmatprep.subr.bf16.mxu0 %v99
    %119 = vmatpush1.bf16.msra.mxu0 %v98
    %120 = vmatprep.subr.bf16.mxu0 %v101
    %121 = vmatpush1.bf16.msra.mxu0 %v100
    %122 = vmatprep.subr.bf16.mxu0 0
    %123 = vmatpush1.bf16.msra.mxu0 0
    %124 = vmatprep.subr.bf16.mxu0 0
    %125 = vmatpush1.bf16.msra.mxu0 0
    %126 = vmatprep.subr.bf16.mxu0 0
    %127 = vmatpush1.bf16.msra.mxu0 0
    %128 = vmatprep.subr.bf16.mxu0 0
    %129 = vmatpush1.bf16.msra.mxu0 0
    %130 = vmatprep.subr.bf16.mxu0 0
    %131 = vmatpush1.bf16.msra.mxu0 0
    %132 = vmatprep.subr.bf16.mxu0 0
    %133 = vmatpush1.bf16.msra.mxu0 0
    %134 = vmatprep.subr.bf16.mxu0 0
    %135 = vmatpush1.bf16.msra.mxu0 0
    %136 = vmatprep.subr.bf16.mxu0 0
    %137 = vmatpush1.bf16.msra.mxu0 0
    %138 = vmatprep.subr.bf16.mxu0 0
    %139 = vmatpush1.bf16.msra.mxu0 0
    %140 = vmatprep.subr.bf16.mxu0 0
    %141 = vmatpush1.bf16.msra.mxu0 0
    %142 = vmatprep.subr.bf16.mxu0 0
    %143 = vmatpush1.bf16.msra.mxu0 0
    %144 = vmatprep.subr.bf16.mxu0 0
    %145 = vmatpush1.bf16.msra.mxu0 0
    %146 = vmatprep.mubr.bf16.mxu0 0
    %147 = vmatmul.mubr.bf16.gmra.mrb[0].mxu0 %v112
    %v148 = vpop.f32.mrb[0].mxu0
    %v149 = vadd.f32 %v63, %v148
    %v150 = vpop.f32.mrb[0].mxu0
    %v151 = vadd.f32 %v67, %v150
    %v152 = vpop.f32.mrb[0].mxu0
    %v153 = vpop.f32.mrb[0].mxu0
    %154 = vdwg.mxu0
    %v155 = vmax.f32 %v149, 0.0
    %v156 = vmax.f32 %v151, 0.0
    %v157 = vpack.c.bf16 %v155, %v155
    %v158 = vpack.c.bf16 %v156, %v156
    %v159 = vld [vmem:[#allocation2] sm:$0xff]
    %v160 = vld [vmem:[#allocation2 + $0x8] sm:$0xff]
    %v161 = vld [vmem:[#allocation2 + $0x10] sm:$0xff]
    %v162 = vld [vmem:[#allocation2 + $0x18] sm:$0xff]
    %v163 = vld [vmem:[#allocation2 + $0x20] sm:$0xff]
    %v164 = vld [vmem:[#allocation2 + $0x28] sm:$0xff]
    %v165 = vld [vmem:[#allocation2 + $0x30] sm:$0xff]
    %v166 = vld [vmem:[#allocation2 + $0x38] sm:$0xff]
    %v167 = vld [vmem:[#allocation2 + $0x40] sm:$0xff]
    %v168 = vld [vmem:[#allocation2 + $0x48] sm:$0xff]
    %v169 = vld [vmem:[#allocation2 + $0x50] sm:$0xff]
    %v170 = vld [vmem:[#allocation2 + $0x58] sm:$0xff]
    %v171 = vld [vmem:[#allocation2 + $0x60] sm:$0xff]
    %v172 = vld [vmem:[#allocation2 + $0x68] sm:$0xff]
    %v173 = vld [vmem:[#allocation2 + $0x70] sm:$0xff]
    %v174 = vld [vmem:[#allocation2 + $0x78] sm:$0xff]
    %v175 = vld [vmem:[#allocation2 + $0x80] sm:$0xff]
    %v176 = vld [vmem:[#allocation2 + $0x88] sm:$0xff]
    %v177 = vld [vmem:[#allocation2 + $0x90] sm:$0xff]
    %v178 = vld [vmem:[#allocation2 + $0x98] sm:$0xff]
    %v179 = vld [vmem:[#allocation2 + $0xa0] sm:$0xff]
    %v180 = vld [vmem:[#allocation2 + $0xa8] sm:$0xff]
    %v181 = vld [vmem:[#allocation2 + $0xb0] sm:$0xff]
    %v182 = vld [vmem:[#allocation2 + $0xb8] sm:$0xff]
    %v183 = vld [vmem:[#allocation2 + $0xc0] sm:$0xff]
    %v184 = vld [vmem:[#allocation2 + $0xc8] sm:$0xff]
    %v185 = vld [vmem:[#allocation2 + $0xd0] sm:$0xff]
    %v186 = vld [vmem:[#allocation2 + $0xd8] sm:$0xff]
    %v187 = vld [vmem:[#allocation2 + $0xe0] sm:$0xff]
    %v188 = vld [vmem:[#allocation2 + $0xe8] sm:$0xff]
    %v189 = vld [vmem:[#allocation2 + $0xf0] sm:$0xff]
    %v190 = vld [vmem:[#allocation2 + $0xf8] sm:$0xff]
    %v191 = vld [vmem:[%s4] sm:$0x3]
    %v193 = vlaneseq
    %v194 = vshrl.u32 %v193, 7
    %v195 = vsub.s32 0, %v194
    %v196 = vrot.slane %v191, %v195
    %v197 = vlaneseq
    %v198 = vshrl.u32 %v197, 7
    %v199 = vsub.s32 1, %v198
    %v200 = vrot.slane %v191, %v199
    %v235 = vunpack.c.l.b16 %v159
    %v236 = vunpack.c.h.b16 %v159
    %v237 = vunpack.c.l.b16 %v160
    %v238 = vunpack.c.h.b16 %v160
    %v239 = vunpack.c.l.b16 %v161
    %v240 = vunpack.c.h.b16 %v161
    %v241 = vunpack.c.l.b16 %v162
    %v242 = vunpack.c.h.b16 %v162
    %v243 = vunpack.c.l.b16 %v163
    %v244 = vunpack.c.h.b16 %v163
    %v245 = vunpack.c.l.b16 %v164
    %v246 = vunpack.c.h.b16 %v164
    %v247 = vunpack.c.l.b16 %v165
    %v248 = vunpack.c.h.b16 %v165
    %v249 = vunpack.c.l.b16 %v166
    %v250 = vunpack.c.h.b16 %v166
    %v251 = vunpack.c.l.b16 %v167
    %v252 = vunpack.c.h.b16 %v167
    %v253 = vunpack.c.l.b16 %v168
    %v254 = vunpack.c.h.b16 %v168
    %v255 = vunpack.c.l.b16 %v169
    %v256 = vunpack.c.h.b16 %v169
    %v257 = vunpack.c.l.b16 %v170
    %v258 = vunpack.c.h.b16 %v170
    %v259 = vunpack.c.l.b16 %v171
    %v260 = vunpack.c.h.b16 %v171
    %v261 = vunpack.c.l.b16 %v172
    %v262 = vunpack.c.h.b16 %v172
    %v263 = vunpack.c.l.b16 %v173
    %v264 = vunpack.c.h.b16 %v173
    %v265 = vunpack.c.l.b16 %v174
    %v266 = vunpack.c.h.b16 %v174
    %v267 = vunpack.c.l.b16 %v175
    %v268 = vunpack.c.h.b16 %v175
    %v269 = vunpack.c.l.b16 %v176
    %v270 = vunpack.c.h.b16 %v176
    %v271 = vunpack.c.l.b16 %v177
    %v272 = vunpack.c.h.b16 %v177
    %v273 = vunpack.c.l.b16 %v178
    %v274 = vunpack.c.h.b16 %v178
    %v275 = vunpack.c.l.b16 %v179
    %v276 = vunpack.c.h.b16 %v179
    %v277 = vunpack.c.l.b16 %v180
    %v278 = vunpack.c.h.b16 %v180
    %v279 = vunpack.c.l.b16 %v181
    %v280 = vunpack.c.h.b16 %v181
    %v281 = vunpack.c.l.b16 %v182
    %v282 = vunpack.c.h.b16 %v182
    %v283 = vunpack.c.l.b16 %v183
    %v284 = vunpack.c.h.b16 %v183
    %v285 = vunpack.c.l.b16 %v184
    %v286 = vunpack.c.h.b16 %v184
    %v287 = vunpack.c.l.b16 %v185
    %v288 = vunpack.c.h.b16 %v185
    %v289 = vunpack.c.l.b16 %v186
    %v290 = vunpack.c.h.b16 %v186
    %v291 = vunpack.c.l.b16 %v187
    %v292 = vunpack.c.h.b16 %v187
    %v293 = vunpack.c.l.b16 %v188
    %v294 = vunpack.c.h.b16 %v188
    %v295 = vunpack.c.l.b16 %v189
    %v296 = vunpack.c.h.b16 %v189
    %v297 = vunpack.c.l.b16 %v190
    %v298 = vunpack.c.h.b16 %v190
    %v299 = vpack.c.b16 %v237, %v235
    %v300 = vpack.c.b16 %v238, %v236
    %v301 = vpack.c.b16 %v241, %v239
    %v302 = vpack.c.b16 %v242, %v240
    %v303 = vpack.c.b16 %v245, %v243
    %v304 = vpack.c.b16 %v246, %v244
    %v305 = vpack.c.b16 %v249, %v247
    %v306 = vpack.c.b16 %v250, %v248
    %v307 = vpack.c.b16 %v253, %v251
    %v308 = vpack.c.b16 %v254, %v252
    %v309 = vpack.c.b16 %v257, %v255
    %v310 = vpack.c.b16 %v258, %v256
    %v311 = vpack.c.b16 %v261, %v259
    %v312 = vpack.c.b16 %v262, %v260
    %v313 = vpack.c.b16 %v265, %v263
    %v314 = vpack.c.b16 %v266, %v264
    %v315 = vpack.c.b16 %v269, %v267
    %v316 = vpack.c.b16 %v270, %v268
    %v317 = vpack.c.b16 %v273, %v271
    %v318 = vpack.c.b16 %v274, %v272
    %v319 = vpack.c.b16 %v277, %v275
    %v320 = vpack.c.b16 %v278, %v276
    %v321 = vpack.c.b16 %v281, %v279
    %v322 = vpack.c.b16 %v282, %v280
    %v323 = vpack.c.b16 %v285, %v283
    %v324 = vpack.c.b16 %v286, %v284
    %v325 = vpack.c.b16 %v289, %v287
    %v326 = vpack.c.b16 %v290, %v288
    %v327 = vpack.c.b16 %v293, %v291
    %v328 = vpack.c.b16 %v294, %v292
    %v329 = vpack.c.b16 %v297, %v295
    %v330 = vpack.c.b16 %v298, %v296
    %363 = vmatprep.subr.bf16.mxu0 %v300
    %364 = vmatpush1.bf16.msra.mxu0 %v299
    %365 = vmatprep.subr.bf16.mxu0 %v302
    %366 = vmatpush1.bf16.msra.mxu0 %v301
    %367 = vmatprep.subr.bf16.mxu0 %v304
    %368 = vmatpush1.bf16.msra.mxu0 %v303
    %369 = vmatprep.subr.bf16.mxu0 %v306
    %370 = vmatpush1.bf16.msra.mxu0 %v305
    %371 = vmatprep.subr.bf16.mxu0 %v308
    %372 = vmatpush1.bf16.msra.mxu0 %v307
    %373 = vmatprep.subr.bf16.mxu0 %v310
    %374 = vmatpush1.bf16.msra.mxu0 %v309
    %375 = vmatprep.subr.bf16.mxu0 %v312
    %376 = vmatpush1.bf16.msra.mxu0 %v311
    %377 = vmatprep.subr.bf16.mxu0 %v314
    %378 = vmatpush1.bf16.msra.mxu0 %v313
    %379 = vmatprep.subr.bf16.mxu0 %v316
    %380 = vmatpush1.bf16.msra.mxu0 %v315
    %381 = vmatprep.subr.bf16.mxu0 %v318
    %382 = vmatpush1.bf16.msra.mxu0 %v317
    %383 = vmatprep.subr.bf16.mxu0 %v320
    %384 = vmatpush1.bf16.msra.mxu0 %v319
    %385 = vmatprep.subr.bf16.mxu0 %v322
    %386 = vmatpush1.bf16.msra.mxu0 %v321
    %387 = vmatprep.subr.bf16.mxu0 %v324
    %388 = vmatpush1.bf16.msra.mxu0 %v323
    %389 = vmatprep.subr.bf16.mxu0 %v326
    %390 = vmatpush1.bf16.msra.mxu0 %v325
    %391 = vmatprep.subr.bf16.mxu0 %v328
    %392 = vmatpush1.bf16.msra.mxu0 %v327
    %393 = vmatprep.subr.bf16.mxu0 %v330
    %394 = vmatpush1.bf16.msra.mxu0 %v329
    %395 = vmatprep.mubr.bf16.mxu0 %v158
    %396 = vmatmul.mubr.bf16.gmra.mrb[0].mxu0 %v157
    %v397 = vpop.f32.mrb[0].mxu0
    %v398 = vadd.f32 %v196, %v397
    %v399 = vpop.f32.mrb[0].mxu0
    %v400 = vadd.f32 %v200, %v399
    %v401 = vpop.f32.mrb[0].mxu0
    %v402 = vpop.f32.mrb[0].mxu0
    %403 = vdwg.mxu0
    %v404 = vmax.f32 %v398, 0.0
    %v405 = vmax.f32 %v400, 0.0
    %v406 = vpack.c.bf16 %v404, %v404
    %v407 = vpack.c.bf16 %v405, %v405
    %v408 = vld [vmem:[%s5] sm:$0xf]
    %v409 = vld [vmem:[%s5 + $0x4] sm:$0xf]
    %v410 = vld [vmem:[%s5 + $0x8] sm:$0xf]
    %v411 = vld [vmem:[%s5 + $0xc] sm:$0xf]
    %v412 = vld [vmem:[%s5 + $0x10] sm:$0xf]
    %v413 = vld [vmem:[%s5 + $0x14] sm:$0xf]
    %v414 = vld [vmem:[%s5 + $0x18] sm:$0xf]
    %v415 = vld [vmem:[%s5 + $0x1c] sm:$0xf]
    %v416 = vld [vmem:[%s5 + $0x20] sm:$0xf]
    %v417 = vld [vmem:[%s5 + $0x24] sm:$0xf]
    %v418 = vld [vmem:[%s5 + $0x28] sm:$0xf]
    %v419 = vld [vmem:[%s5 + $0x2c] sm:$0xf]
    %v420 = vld [vmem:[%s5 + $0x30] sm:$0xf]
    %v421 = vld [vmem:[%s5 + $0x34] sm:$0xf]
    %v422 = vld [vmem:[%s5 + $0x38] sm:$0xf]
    %v423 = vld [vmem:[%s5 + $0x3c] sm:$0xf]
    %v424 = vld [vmem:[%s5 + $0x40] sm:$0xf]
    %v425 = vld [vmem:[%s5 + $0x44] sm:$0xf]
    %v426 = vld [vmem:[%s5 + $0x48] sm:$0xf]
    %v427 = vld [vmem:[%s5 + $0x4c] sm:$0xf]
    %v428 = vld [vmem:[%s5 + $0x50] sm:$0xf]
    %v429 = vld [vmem:[%s5 + $0x54] sm:$0xf]
    %v430 = vld [vmem:[%s5 + $0x58] sm:$0xf]
    %v431 = vld [vmem:[%s5 + $0x5c] sm:$0xf]
    %v432 = vld [vmem:[%s5 + $0x60] sm:$0xf]
    %v433 = vld [vmem:[%s5 + $0x64] sm:$0xf]
    %v434 = vld [vmem:[%s5 + $0x68] sm:$0xf]
    %v435 = vld [vmem:[%s5 + $0x6c] sm:$0xf]
    %v436 = vld [vmem:[%s5 + $0x70] sm:$0xf]
    %v437 = vld [vmem:[%s5 + $0x74] sm:$0xf]
    %v438 = vld [vmem:[%s5 + $0x78] sm:$0xf]
    %v439 = vld [vmem:[%s5 + $0x7c] sm:$0xf]
    %v440 = vld [vmem:[%s6] sm:$0x1]
    %v442 = vlaneseq
    %v443 = vshrl.u32 %v442, 7
    %v444 = vsub.s32 0, %v443
    %v445 = vrot.slane %v440, %v444
    %v479 = vunpack.c.l.b16 %v408
    %v480 = vunpack.c.l.b16 %v409
    %v481 = vunpack.c.l.b16 %v410
    %v482 = vunpack.c.l.b16 %v411
    %v483 = vunpack.c.l.b16 %v412
    %v484 = vunpack.c.l.b16 %v413
    %v485 = vunpack.c.l.b16 %v414
    %v486 = vunpack.c.l.b16 %v415
    %v487 = vunpack.c.l.b16 %v416
    %v488 = vunpack.c.l.b16 %v417
    %v489 = vunpack.c.l.b16 %v418
    %v490 = vunpack.c.l.b16 %v419
    %v491 = vunpack.c.l.b16 %v420
    %v492 = vunpack.c.l.b16 %v421
    %v493 = vunpack.c.l.b16 %v422
    %v494 = vunpack.c.l.b16 %v423
    %v495 = vunpack.c.l.b16 %v424
    %v496 = vunpack.c.l.b16 %v425
    %v497 = vunpack.c.l.b16 %v426
    %v498 = vunpack.c.l.b16 %v427
    %v499 = vunpack.c.l.b16 %v428
    %v500 = vunpack.c.l.b16 %v429
    %v501 = vunpack.c.l.b16 %v430
    %v502 = vunpack.c.l.b16 %v431
    %v503 = vunpack.c.l.b16 %v432
    %v504 = vunpack.c.l.b16 %v433
    %v505 = vunpack.c.l.b16 %v434
    %v506 = vunpack.c.l.b16 %v435
    %v507 = vunpack.c.l.b16 %v436
    %v508 = vunpack.c.l.b16 %v437
    %v509 = vunpack.c.l.b16 %v438
    %v510 = vunpack.c.l.b16 %v439
    %v511 = vpack.c.b16 %v480, %v479
    %v512 = vpack.c.b16 %v482, %v481
    %v513 = vpack.c.b16 %v484, %v483
    %v514 = vpack.c.b16 %v486, %v485
    %v515 = vpack.c.b16 %v488, %v487
    %v516 = vpack.c.b16 %v490, %v489
    %v517 = vpack.c.b16 %v492, %v491
    %v518 = vpack.c.b16 %v494, %v493
    %v519 = vpack.c.b16 %v496, %v495
    %v520 = vpack.c.b16 %v498, %v497
    %v521 = vpack.c.b16 %v500, %v499
    %v522 = vpack.c.b16 %v502, %v501
    %v523 = vpack.c.b16 %v504, %v503
    %v524 = vpack.c.b16 %v506, %v505
    %v525 = vpack.c.b16 %v508, %v507
    %v526 = vpack.c.b16 %v510, %v509
    %543 = vmatprep.subr.bf16.mxu0 0
    %544 = vmatpush1.bf16.msra.mxu0 %v511
    %545 = vmatprep.subr.bf16.mxu0 0
    %546 = vmatpush1.bf16.msra.mxu0 %v512
    %547 = vmatprep.subr.bf16.mxu0 0
    %548 = vmatpush1.bf16.msra.mxu0 %v513
    %549 = vmatprep.subr.bf16.mxu0 0
    %550 = vmatpush1.bf16.msra.mxu0 %v514
    %551 = vmatprep.subr.bf16.mxu0 0
    %552 = vmatpush1.bf16.msra.mxu0 %v515
    %553 = vmatprep.subr.bf16.mxu0 0
    %554 = vmatpush1.bf16.msra.mxu0 %v516
    %555 = vmatprep.subr.bf16.mxu0 0
    %556 = vmatpush1.bf16.msra.mxu0 %v517
    %557 = vmatprep.subr.bf16.mxu0 0
    %558 = vmatpush1.bf16.msra.mxu0 %v518
    %559 = vmatprep.subr.bf16.mxu0 0
    %560 = vmatpush1.bf16.msra.mxu0 %v519
    %561 = vmatprep.subr.bf16.mxu0 0
    %562 = vmatpush1.bf16.msra.mxu0 %v520
    %563 = vmatprep.subr.bf16.mxu0 0
    %564 = vmatpush1.bf16.msra.mxu0 %v521
    %565 = vmatprep.subr.bf16.mxu0 0
    %566 = vmatpush1.bf16.msra.mxu0 %v522
    %567 = vmatprep.subr.bf16.mxu0 0
    %568 = vmatpush1.bf16.msra.mxu0 %v523
    %569 = vmatprep.subr.bf16.mxu0 0
    %570 = vmatpush1.bf16.msra.mxu0 %v524
    %571 = vmatprep.subr.bf16.mxu0 0
    %572 = vmatpush1.bf16.msra.mxu0 %v525
    %573 = vmatprep.subr.bf16.mxu0 0
    %574 = vmatpush1.bf16.msra.mxu0 %v526
    %575 = vmatprep.mubr.bf16.mxu0 %v407
    %576 = vmatmul.mubr.bf16.gmra.mrb[0].mxu0 %v406
    %v577 = vpop.f32.mrb[0].mxu0
    %v578 = vadd.f32 %v445, %v577
    %v579 = vpop.f32.mrb[0].mxu0
    %v580 = vpop.f32.mrb[0].mxu0
    %v581 = vpop.f32.mrb[0].mxu0
    %582 = vdwg.mxu0
    %v583 = vmax.f32 %v578, 0.0
    %v584 = vpack.c.bf16 %v583, %v583
    %v585 = vld [vmem:[%s7] sm:$0xf]
    %v586 = vld [vmem:[%s7 + $0x4] sm:$0xf]
    %v587 = vld [vmem:[%s7 + $0x8] sm:$0xf]
    %v588 = vld [vmem:[%s7 + $0xc] sm:$0xf]
    %v589 = vld [vmem:[%s8] sm:$0x1]
    %v591 = vlaneseq
    %v592 = vshrl.u32 %v591, 7
    %v593 = vsub.s32 0, %v592
    %v594 = vrot.slane %v589, %v593
    %v600 = vunpack.c.l.b16 %v585
    %v601 = vunpack.c.l.b16 %v586
    %v602 = vunpack.c.l.b16 %v587
    %v603 = vunpack.c.l.b16 %v588
    %v604 = vpack.c.b16 %v601, %v600
    %v605 = vpack.c.b16 %v603, %v602
    %vm608 = vcmask 261120
    %v610 = vsel %vm608, %v584, 0
    %612 = vmatprep.subr.bf16.mxu0 0
    %613 = vmatpush1.bf16.msra.mxu0 %v604
    %614 = vmatprep.subr.bf16.mxu0 0
    %615 = vmatpush1.bf16.msra.mxu0 %v605
    %616 = vmatprep.subr.bf16.mxu0 0
    %617 = vmatpush1.bf16.msra.mxu0 0
    %618 = vmatprep.subr.bf16.mxu0 0
    %619 = vmatpush1.bf16.msra.mxu0 0
    %620 = vmatprep.subr.bf16.mxu0 0
    %621 = vmatpush1.bf16.msra.mxu0 0
    %622 = vmatprep.subr.bf16.mxu0 0
    %623 = vmatpush1.bf16.msra.mxu0 0
    %624 = vmatprep.subr.bf16.mxu0 0
    %625 = vmatpush1.bf16.msra.mxu0 0
    %626 = vmatprep.subr.bf16.mxu0 0
    %627 = vmatpush1.bf16.msra.mxu0 0
    %628 = vmatprep.subr.bf16.mxu0 0
    %629 = vmatpush1.bf16.msra.mxu0 0
    %630 = vmatprep.subr.bf16.mxu0 0
    %631 = vmatpush1.bf16.msra.mxu0 0
    %632 = vmatprep.subr.bf16.mxu0 0
    %633 = vmatpush1.bf16.msra.mxu0 0
    %634 = vmatprep.subr.bf16.mxu0 0
    %635 = vmatpush1.bf16.msra.mxu0 0
    %636 = vmatprep.subr.bf16.mxu0 0
    %637 = vmatpush1.bf16.msra.mxu0 0
    %638 = vmatprep.subr.bf16.mxu0 0
    %639 = vmatpush1.bf16.msra.mxu0 0
    %640 = vmatprep.subr.bf16.mxu0 0
    %641 = vmatpush1.bf16.msra.mxu0 0
    %642 = vmatprep.subr.bf16.mxu0 0
    %643 = vmatpush1.bf16.msra.mxu0 0
    %644 = vmatprep.mubr.bf16.mxu0 0
    %645 = vmatmul.mubr.bf16.gmra.mrb[0].mxu0 %v610
    %v646 = vpop.f32.mrb[0].mxu0
    %v647 = vadd.f32 %v594, %v646
    %v648 = vpop.f32.mrb[0].mxu0
    %v649 = vpop.f32.mrb[0].mxu0
    %v650 = vpop.f32.mrb[0].mxu0
    %651 = vdwg.mxu0
    %v652 = vxor.u32 %v647, 2147483648
    %v653 = vmul.f32 %v652, 1.442695
    %v654 = vpow.pop %v653
    %v655 = vadd.f32 %v654, 1.0
    %v656 = vrcp.pop %v655
    %v657 = vmul.f32 1.0, %v656
    %vm658 = vcmask 25600
    %659 = vst.msk [vmem:[#allocation5] sm:$0x3] %vm658, %v657
    // Predicated region
    $region42: #{fused_forward.1} parent=1 // pred_check
      _
    $region43: #{fused_forward.1} parent=1 // pred_check_branch
      %661 = sbr.rel (0) target = $region45
    $region44: #{fused_forward.1} parent=1 // pred_region
      %s663 = ssub.s32 32, 32
      %664 = vsyncadd [#allocation4], %s663
      %s666 = sshll.u32 [#allocation5], 4
      %s667 = int_to_ptr.vmem [resolvable:$true] %s666
      %669 = dma.vmem_to_hbm [thread:$0]  %s667, 32, %s9, [#allocation4]
    $region45: #{fused_forward.1} parent=1 // pred_fallthru
      _
    // Predicated region
    $region46: #{fused_forward.1} parent=1 // pred_check
      _
    $region47: #{fused_forward.1} parent=1 // pred_check_branch
      %671 = sbr.rel (0) target = $region49
    $region48: #{fused_forward.1} parent=1 // pred_region
      %672 = dma.done [#allocation4], 32
    $region49: #{fused_forward.1} parent=1 // pred_fallthru
      _
    %673 = vsyncpa [#allocation3], 1
    %674 = vsyncpa [#allocation4], 1

</llo_original>
